<compile_context>
chip_gen: v5e
topology: v5e:2x2
jax: 0.10.0
libtpu: 0.0.40
codegen_flags: <defaults>
</compile_context>

<pallas_src>
import math

import jax
import jax.numpy as jnp
from jax.experimental import pallas as pl
from jax.experimental.pallas import tpu as pltpu

_LANE = 128      # vreg lane width
_SUBLANE = 8     # f32 sublane count


def _mlp_kernel(x_ref, w1_ref, b1_ref, w2_ref, b2_ref, o_ref):
    # layer1: Linear(input_size, hidden) on the MXU (bf16 in, f32 accumulate)
    h = jnp.dot(x_ref[...], w1_ref[...], preferred_element_type=jnp.float32)
    # bias + ReLU epilogue in f32 on the VPU: (B, H) + (1, H)
    h = jnp.maximum(h + b1_ref[...], 0.0)
    # layer2: Linear(hidden, out_padded_to_128) on the MXU
    out = jnp.dot(h.astype(jnp.bfloat16), w2_ref[...],
                  preferred_element_type=jnp.float32)
    # lane-dense (B, 128) store -> unmasked vst
    o_ref[...] = (out + b2_ref[...]).astype(o_ref.dtype)


def prepare_params(w1, b1, w2, b2):
    """One-time layout prep (bf16 cast + lane padding). Hoist out of hot loops."""
    hidden = w1.shape[1]
    out_size = w2.shape[1]
    out_pad = _LANE * pl.cdiv(out_size, _LANE)

    w1b = w1.astype(jnp.bfloat16)
    w2p = jnp.zeros((hidden, out_pad), jnp.bfloat16).at[:, :out_size].set(
        w2.astype(jnp.bfloat16))
    b1f = b1.astype(jnp.float32).reshape(1, hidden)
    b2p = jnp.zeros((1, out_pad), jnp.float32).at[:, :out_size].set(
        b2.astype(jnp.float32).reshape(1, out_size))
    return w1b, b1f, w2p, b2p, out_size, out_pad


def linear_qnet_forward(x, w1, b1, w2, b2, *, batch_tile=512):
    """Fused two-layer MLP forward matching Linear_QNet.forward.

    x : (B, in)        float32
    w1: (in, hidden)   float32   (transposed vs. torch layer1.weight)
    b1: (1, hidden)    float32
    w2: (hidden, out)  float32   (transposed vs. torch layer2.weight)
    b2: (1, out)       float32
    returns (B, out)   float32
    """
    batch, in_size = x.shape
    hidden = w1.shape[1]

    w1b, b1f, w2p, b2p, out_size, out_pad = prepare_params(w1, b1, w2, b2)

    use_grid = batch > batch_tile
    if use_grid:
        bp = batch_tile * pl.cdiv(batch, batch_tile)   # pad to tile multiple
    else:
        bp = _SUBLANE * pl.cdiv(batch, _SUBLANE)        # pad to sublane multiple

    xb = x.astype(jnp.bfloat16)
    if bp != batch:
        xb = jnp.zeros((bp, in_size), jnp.bfloat16).at[:batch].set(xb)

    flops = 2 * bp * (in_size * hidden + hidden * out_pad)
    bytes_accessed = (xb.size * 2 + w1b.size * 2 + w2p.size * 2
                      + b1f.size * 4 + b2p.size * 4 + bp * out_pad * 4)
    cost = pl.CostEstimate(flops=flops, transcendentals=0,
                           bytes_accessed=bytes_accessed)

    if not use_grid:
        # Small batch: single block, whole problem VMEM-resident, no grid overhead.
        vmem = pl.BlockSpec(memory_space=pltpu.MemorySpace.VMEM)
        out_p = pl.pallas_call(
            _mlp_kernel,
            out_shape=jax.ShapeDtypeStruct((bp, out_pad), jnp.float32),
            in_specs=[vmem, vmem, vmem, vmem, vmem],
            out_specs=vmem,
            cost_estimate=cost,
        )(xb, w1b, b1f, w2p, b2p)
    else:
        # Large batch: tile ONLY the batch axis; weights/biases stay VMEM-resident
        # (index_map always (0, 0)); "parallel" lets v7x shard batch across its 2 TCs.
        grid = (bp // batch_tile,)
        out_p = pl.pallas_call(
            _mlp_kernel,
            out_shape=jax.ShapeDtypeStruct((bp, out_pad), jnp.float32),
            grid_spec=pltpu.PrefetchScalarGridSpec(
                num_scalar_prefetch=0,
                grid=grid,
                in_specs=[
                    pl.BlockSpec((batch_tile, in_size), lambda i: (i, 0)),
                    pl.BlockSpec((in_size, hidden), lambda i: (0, 0)),
                    pl.BlockSpec((1, hidden), lambda i: (0, 0)),
                    pl.BlockSpec((hidden, out_pad), lambda i: (0, 0)),
                    pl.BlockSpec((1, out_pad), lambda i: (0, 0)),
                ],
                out_specs=pl.BlockSpec((batch_tile, out_pad), lambda i: (i, 0)),
            ),
            compiler_params=pltpu.CompilerParams(
                dimension_semantics=("parallel",)),
            cost_estimate=cost,
        )(xb, w1b, b1f, w2p, b2p)

    return out_p[:batch, :out_size]


def init_params(key, input_size, hidden_size, output_size):
    """Deterministic init mimicking PyTorch nn.Linear default:
    U(-1/sqrt(fan_in), 1/sqrt(fan_in)) for weights and biases."""
    k1, k2, k3, k4 = jax.random.split(key, 4)
    bound1 = 1.0 / math.sqrt(input_size)
    bound2 = 1.0 / math.sqrt(hidden_size)
    w1 = jax.random.uniform(k1, (input_size, hidden_size), jnp.float32,
                            -bound1, bound1)
    b1 = jax.random.uniform(k2, (1, hidden_size), jnp.float32, -bound1, bound1)
    w2 = jax.random.uniform(k3, (hidden_size, output_size), jnp.float32,
                            -bound2, bound2)
    b2 = jax.random.uniform(k4, (1, output_size), jnp.float32, -bound2, bound2)
    return w1, b1, w2, b2


def _ref_forward(x, w1, b1, w2, b2):
    """Pure-JAX reference mirroring the kernel's bf16 operand rounding."""
    xb = x.astype(jnp.bfloat16).astype(jnp.float32)
    w1b = w1.astype(jnp.bfloat16).astype(jnp.float32)
    w2b = w2.astype(jnp.bfloat16).astype(jnp.float32)
    h = jnp.maximum(xb @ w1b + b1, 0.0)
    hb = h.astype(jnp.bfloat16).astype(jnp.float32)
    return hb @ w2b + b2


if __name__ == "__main__":
    # Snake-AI style sizes: 11-dim state, 256 hidden, 3 actions.
    input_size, hidden_size, output_size = 11, 256, 3

    key = jax.random.PRNGKey(0)
    kx, kp, kb = jax.random.split(key, 3)
    w1, b1, w2, b2 = init_params(kp, input_size, hidden_size, output_size)

    # --- small-batch (inference) path: single block, no grid ---
    batch = 4
    x = jax.random.normal(kx, (batch, input_size), jnp.float32)
    out = jax.block_until_ready(linear_qnet_forward(x, w1, b1, w2, b2))
    ref = _ref_forward(x, w1, b1, w2, b2)
    assert out.shape == (batch, output_size)
    assert jnp.allclose(out, ref, atol=1e-2, rtol=1e-2)

    # --- large-batch (training replay) path: batch-only tiling, resident weights ---
    big_batch = 1024
    xb_big = jax.random.normal(kb, (big_batch, input_size), jnp.float32)
    out_big = jax.block_until_ready(
        linear_qnet_forward(xb_big, w1, b1, w2, b2, batch_tile=256))
    ref_big = _ref_forward(xb_big, w1, b1, w2, b2)
    assert out_big.shape == (big_batch, output_size)
    assert jnp.allclose(out_big, ref_big, atol=1e-2, rtol=1e-2)

    print("KERNEL_OK")
</pallas_src>

<mosaic_0001>
module attributes {stable_mosaic.version = 11 : i64} {
  func.func @_mlp_kernel(%arg0: memref<8x11xbf16, #tpu.memory_space<vmem>>, %arg1: memref<11x256xbf16, #tpu.memory_space<vmem>>, %arg2: memref<1x256xf32, #tpu.memory_space<vmem>>, %arg3: memref<256x128xbf16, #tpu.memory_space<vmem>>, %arg4: memref<1x128xf32, #tpu.memory_space<vmem>>, %arg5: memref<8x128xf32, #tpu.memory_space<vmem>>) attributes {dimension_semantics = [], scalar_prefetch = 0 : i64, scratch_operands = 0 : i64, tpu.core_type = #tpu.core_type<tc>} {
    %c0 = arith.constant 0 : index
    %c0_0 = arith.constant 0 : index
    %0 = vector.load %arg0[%c0, %c0_0] : memref<8x11xbf16, #tpu.memory_space<vmem>>, vector<8x11xbf16>
    %c0_1 = arith.constant 0 : index
    %c0_2 = arith.constant 0 : index
    %1 = vector.load %arg1[%c0_1, %c0_2] : memref<11x256xbf16, #tpu.memory_space<vmem>>, vector<11x256xbf16>
    %cst = arith.constant dense<0.000000e+00> : vector<8x256xf32>
    %2 = tpu.matmul %0, %1, %cst {dimension_numbers = #tpu.dot_dimension_numbers<[1], [0], [0], [1], [0, 0, 1, 1], [], []>} : vector<8x11xbf16>, vector<11x256xbf16>, vector<8x256xf32> -> vector<8x256xf32>
    %c0_3 = arith.constant 0 : index
    %c0_4 = arith.constant 0 : index
    %3 = vector.load %arg2[%c0_3, %c0_4] : memref<1x256xf32, #tpu.memory_space<vmem>>, vector<1x256xf32>
    %4 = vector.broadcast %3 : vector<1x256xf32> to vector<8x256xf32>
    %5 = arith.addf %2, %4 : vector<8x256xf32>
    %cst_5 = arith.constant 0.000000e+00 : f32
    %6 = vector.broadcast %cst_5 : f32 to vector<8x256xf32>
    %7 = arith.maximumf %5, %6 : vector<8x256xf32>
    %8 = arith.truncf %7 : vector<8x256xf32> to vector<8x256xbf16>
    %c0_6 = arith.constant 0 : index
    %c0_7 = arith.constant 0 : index
    %9 = vector.load %arg3[%c0_6, %c0_7] : memref<256x128xbf16, #tpu.memory_space<vmem>>, vector<256x128xbf16>
    %cst_8 = arith.constant dense<0.000000e+00> : vector<8x128xf32>
    %10 = tpu.matmul %8, %9, %cst_8 {dimension_numbers = #tpu.dot_dimension_numbers<[1], [0], [0], [1], [0, 0, 1, 1], [], []>} : vector<8x256xbf16>, vector<256x128xbf16>, vector<8x128xf32> -> vector<8x128xf32>
    %c0_9 = arith.constant 0 : index
    %c0_10 = arith.constant 0 : index
    %11 = vector.load %arg4[%c0_9, %c0_10] : memref<1x128xf32, #tpu.memory_space<vmem>>, vector<1x128xf32>
    %12 = vector.broadcast %11 : vector<1x128xf32> to vector<8x128xf32>
    %13 = arith.addf %10, %12 : vector<8x128xf32>
    %c0_11 = arith.constant 0 : index
    %c0_12 = arith.constant 0 : index
    %14 = vector.load %arg5[%c0_11, %c0_12] : memref<8x128xf32, #tpu.memory_space<vmem>>, vector<8x128xf32>
    tpu.vector_store %arg5[%c0_11, %c0_12], %13 {strides = array<i32>} : memref<8x128xf32, #tpu.memory_space<vmem>>, vector<8x128xf32>,
    return
  }
}

</mosaic_0001>

<llo_original>
// kernel: tpu_custom_call.1
$region0: #{tpu_custom_call.1}
  #allocation0 [shape = 'u32[]', space=smem, size = 0x4, offset = 0x4, fixed_abs, tag = 'smem constant byte address 0x4 - core index']
  #allocation1 [shape = 'u32[72,128]{1,0:T(1,128)}', space=vmem, size = 0x9000, scoped, tag = 'internal scratch']
  %s0 = inlined_call_operand.hbm [shape: bf16[8,11], index: 0, kind: input, shape index: {}]
  %s1 = inlined_call_operand.hbm [shape: bf16[11,256], index: 1, kind: input, shape index: {}]
  %s2 = inlined_call_operand.hbm [shape: f32[1,256], index: 2, kind: input, shape index: {}]
  %s3 = inlined_call_operand.hbm [shape: bf16[256,128], index: 3, kind: input, shape index: {}]
  %s4 = inlined_call_operand.vmem [shape: f32[1,128], index: 4, kind: input, shape index: {}]
  %s5 = inlined_call_operand.hbm [shape: f32[8,128], index: 5, kind: output, shape index: {}]
  %s6 = sld [smem:[#allocation0]]
  $region46: #{tpu_custom_call.1} parent=0
    _
  %s8 = ssub.s32 1, %s6
  %s9 = scalar_select 0, %s8, %s6
  $region1: #{tpu_custom_call.1} parent=0
    #allocation2 [shape = 'u8[2048]{0}', space=vmem, size = 0x800, scoped, tag = 'input window, operand 0, single buffered']
    #allocation3 [shape = 's32[1]{0}', space=sflag, size = 0x4, scoped, tag = 'scoped memory for tpu_custom_call.1']
    #allocation4 [shape = 's32[1]{0}', space=sflag, size = 0x4, scoped, tag = 'scoped memory for tpu_custom_call.1']
    #allocation5 [shape = 'u8[8192]{0}', space=vmem, size = 0x2000, scoped, tag = 'input window, operand 1, single buffered']
    #allocation6 [shape = 's32[1]{0}', space=sflag, size = 0x4, scoped, tag = 'scoped memory for tpu_custom_call.1']
    #allocation7 [shape = 'u8[1024]{0}', space=vmem, size = 0x400, scoped, tag = 'input window, operand 2, single buffered']
    #allocation8 [shape = 'u8[65536]{0}', space=vmem, size = 0x10000, scoped, tag = 'input window, operand 3, single buffered']
    #allocation9 [shape = 's32[1]{0}', space=sflag, size = 0x4, scoped, tag = 'scoped memory for tpu_custom_call.1']
    #allocation10 [shape = 'u8[4096]{0}', space=vmem, size = 0x1000, scoped, tag = 'output window, operand 0, single buffered']
    %10 = vsyncpa [#allocation3], 0
    %11 = vsyncpa [#allocation6], 0
    %12 = vsyncpa [#allocation9], 0
    %13 = vsyncpa [#allocation4], 0
    // Predicated region
    $region2: #{tpu_custom_call.1} parent=1 // pred_check
      _
    $region3: #{tpu_custom_call.1} parent=1 // pred_check_branch
      %15 = sbr.rel (0) target = $region5
    $region4: #{tpu_custom_call.1} parent=1 // pred_region
      %17 = vsyncadd [#allocation3], 0
      %s19 = sshll.u32 %s0, 4
      %s20 = int_to_ptr.hbm [resolvable:$true] %s19
      %s21 = sshll.u32 [#allocation2], 4
      %s22 = int_to_ptr.vmem [resolvable:$true] %s21
      %24 = dma.hbm_to_vmem [thread:$0]  %s20, 64, %s22, [#allocation3]
    $region5: #{tpu_custom_call.1} parent=1 // pred_fallthru
      _
    // Predicated region
    $region6: #{tpu_custom_call.1} parent=1 // pred_check
      _
    $region7: #{tpu_custom_call.1} parent=1 // pred_check_branch
      %26 = sbr.rel (0) target = $region9
    $region8: #{tpu_custom_call.1} parent=1 // pred_region
      %28 = vsyncadd [#allocation6], 0
      %s29 = sshll.u32 %s1, 4
      %s30 = int_to_ptr.hbm [resolvable:$true] %s29
      %s31 = sshll.u32 [#allocation5], 4
      %s32 = int_to_ptr.vmem [resolvable:$true] %s31
      %37 = dma.hbm_to_vmem [thread:$0]  %s30, 256, %s32, [#allocation6], 128, 128, 8
    $region9: #{tpu_custom_call.1} parent=1 // pred_fallthru
      _
    // Predicated region
    $region10: #{tpu_custom_call.1} parent=1 // pred_check
      _
    $region11: #{tpu_custom_call.1} parent=1 // pred_check_branch
      %39 = sbr.rel (0) target = $region13
    $region12: #{tpu_custom_call.1} parent=1 // pred_region
      %41 = vsyncadd [#allocation6], 0
      %s43 = sshll.u32 %s2, 4
      %s44 = int_to_ptr.hbm [resolvable:$true] %s43
      %s45 = sshll.u32 [#allocation7], 4
      %s46 = int_to_ptr.vmem [resolvable:$true] %s45
      %48 = dma.hbm_to_vmem [thread:$0]  %s44, 32, %s46, [#allocation6]
    $region13: #{tpu_custom_call.1} parent=1 // pred_fallthru
      _
    // Predicated region
    $region14: #{tpu_custom_call.1} parent=1 // pred_check
      _
    $region15: #{tpu_custom_call.1} parent=1 // pred_check_branch
      %50 = sbr.rel (0) target = $region17
    $region16: #{tpu_custom_call.1} parent=1 // pred_region
      %52 = vsyncadd [#allocation9], 0
      %s53 = sshll.u32 %s3, 4
      %s54 = int_to_ptr.hbm [resolvable:$true] %s53
      %s55 = sshll.u32 [#allocation8], 4
      %s56 = int_to_ptr.vmem [resolvable:$true] %s55
      %61 = dma.hbm_to_vmem [thread:$0]  %s54, 2048, %s56, [#allocation9], 64, 64, 4
    $region17: #{tpu_custom_call.1} parent=1 // pred_fallthru
      _
    // Predicated region
    $region18: #{tpu_custom_call.1} parent=1 // pred_check
      _
    $region19: #{tpu_custom_call.1} parent=1 // pred_check_branch
      %63 = sbr.rel (0) target = $region21
    $region20: #{tpu_custom_call.1} parent=1 // pred_region
      _
    $region21: #{tpu_custom_call.1} parent=1 // pred_fallthru
      _
    // Predicated region
    $region22: #{tpu_custom_call.1} parent=1 // pred_check
      _
    $region23: #{tpu_custom_call.1} parent=1 // pred_check_branch
      %65 = sbr.rel (0) target = $region25
    $region24: #{tpu_custom_call.1} parent=1 // pred_region
      %67 = dma.done [#allocation3], 64
    $region25: #{tpu_custom_call.1} parent=1 // pred_fallthru
      _
    // Predicated region
    $region26: #{tpu_custom_call.1} parent=1 // pred_check
      _
    $region27: #{tpu_custom_call.1} parent=1 // pred_check_branch
      %69 = sbr.rel (0) target = $region29
    $region28: #{tpu_custom_call.1} parent=1 // pred_region
      %71 = dma.done [#allocation6], 256
    $region29: #{tpu_custom_call.1} parent=1 // pred_fallthru
      _
    // Predicated region
    $region30: #{tpu_custom_call.1} parent=1 // pred_check
      _
    $region31: #{tpu_custom_call.1} parent=1 // pred_check_branch
      %73 = sbr.rel (0) target = $region33
    $region32: #{tpu_custom_call.1} parent=1 // pred_region
      %75 = dma.done [#allocation6], 32
    $region33: #{tpu_custom_call.1} parent=1 // pred_fallthru
      _
    // Predicated region
    $region34: #{tpu_custom_call.1} parent=1 // pred_check
      _
    $region35: #{tpu_custom_call.1} parent=1 // pred_check_branch
      %77 = sbr.rel (0) target = $region37
    $region36: #{tpu_custom_call.1} parent=1 // pred_region
      %79 = dma.done [#allocation9], 2048
    $region37: #{tpu_custom_call.1} parent=1 // pred_fallthru
      _
    %v81 = vld [vmem:[#allocation2] sm:$0xf]
    %v82 = vld [vmem:[#allocation5] sm:$0xff]
    %v83 = vld [vmem:[#allocation5 + $0x8] sm:$0x33]
    %v84 = vld [vmem:[#allocation7] sm:$0x3]
    %v86 = vperm.slane %v84, 0
    %v87 = vperm.slane %v84, 1
    %v92 = vunpack.c.l.b16 %v82
    %v93 = vunpack.c.h.b16 %v82
    %v94 = vunpack.c.l.b16 %v83
    %v95 = vunpack.c.h.b16 %v83
    %v96 = vpack.c.b16 %v94, %v92
    %v97 = vpack.c.b16 %v95, %v93
    %vm98 = vcmask 89088
    %v100 = vsel %vm98, %v81, 0
    %vm102 = vcmask 1044480
    %vm103 = vcmask 1045504
    %v104 = vsel %vm102, 4294967295, 65535
    %v105 = vsel %vm103, %v104, 0
    %v107 = vand.u32 %v96, %v105
    %v110 = vand.u32 %v97, %v105
    %112 = vmatpush.bf16.msra.mxu0 0
    %113 = vmatpush.bf16.msra.mxu0 0
    %114 = vmatpush.bf16.msra.mxu0 0
    %115 = vmatpush.bf16.msra.mxu0 0
    %116 = vmatpush.bf16.msra.mxu0 0
    %117 = vmatpush.bf16.msra.mxu0 0
    %118 = vmatpush.bf16.msra.mxu0 0
    %119 = vmatpush.bf16.msra.mxu0 %v107
    %120 = vmatmul.bf16.gmra.mxu0 %v100
    %v121 = vpop.f32.mrf.mxu0
    %v122 = vadd.f32 %v86, %v121
    %v123 = vpop.f32.mrf.mxu0
    %124 = vdwg.mxu0
    %125 = vmatpush.bf16.msra.mxu0 0
    %126 = vmatpush.bf16.msra.mxu0 0
    %127 = vmatpush.bf16.msra.mxu0 0
    %128 = vmatpush.bf16.msra.mxu0 0
    %129 = vmatpush.bf16.msra.mxu0 0
    %130 = vmatpush.bf16.msra.mxu0 0
    %131 = vmatpush.bf16.msra.mxu0 0
    %132 = vmatpush.bf16.msra.mxu0 %v110
    %133 = vmatmul.bf16.gmra.mxu0 %v100
    %v134 = vpop.f32.mrf.mxu0
    %v135 = vadd.f32 %v87, %v134
    %v136 = vpop.f32.mrf.mxu0
    %137 = vdwg.mxu0
    %v138 = vmax.f32 %v122, 0.0
    %v139 = vmax.f32 %v135, 0.0
    %v140 = vpack.c.bf16 %v138, %v138
    %v141 = vpack.c.bf16 %v139, %v139
    %v142 = vld [vmem:[#allocation8] sm:$0xf]
    %v143 = vld [vmem:[#allocation8 + $0x4] sm:$0xf]
    %v144 = vld [vmem:[#allocation8 + $0x8] sm:$0xf]
    %v145 = vld [vmem:[#allocation8 + $0xc] sm:$0xf]
    %v146 = vld [vmem:[#allocation8 + $0x10] sm:$0xf]
    %v147 = vld [vmem:[#allocation8 + $0x14] sm:$0xf]
    %v148 = vld [vmem:[#allocation8 + $0x18] sm:$0xf]
    %v149 = vld [vmem:[#allocation8 + $0x1c] sm:$0xf]
    %v150 = vld [vmem:[#allocation8 + $0x20] sm:$0xf]
    %v151 = vld [vmem:[#allocation8 + $0x24] sm:$0xf]
    %v152 = vld [vmem:[#allocation8 + $0x28] sm:$0xf]
    %v153 = vld [vmem:[#allocation8 + $0x2c] sm:$0xf]
    %v154 = vld [vmem:[#allocation8 + $0x30] sm:$0xf]
    %v155 = vld [vmem:[#allocation8 + $0x34] sm:$0xf]
    %v156 = vld [vmem:[#allocation8 + $0x38] sm:$0xf]
    %v157 = vld [vmem:[#allocation8 + $0x3c] sm:$0xf]
    %v158 = vld [vmem:[#allocation8 + $0x40] sm:$0xf]
    %v159 = vld [vmem:[#allocation8 + $0x44] sm:$0xf]
    %v160 = vld [vmem:[#allocation8 + $0x48] sm:$0xf]
    %v161 = vld [vmem:[#allocation8 + $0x4c] sm:$0xf]
    %v162 = vld [vmem:[#allocation8 + $0x50] sm:$0xf]
    %v163 = vld [vmem:[#allocation8 + $0x54] sm:$0xf]
    %v164 = vld [vmem:[#allocation8 + $0x58] sm:$0xf]
    %v165 = vld [vmem:[#allocation8 + $0x5c] sm:$0xf]
    %v166 = vld [vmem:[#allocation8 + $0x60] sm:$0xf]
    %v167 = vld [vmem:[#allocation8 + $0x64] sm:$0xf]
    %v168 = vld [vmem:[#allocation8 + $0x68] sm:$0xf]
    %v169 = vld [vmem:[#allocation8 + $0x6c] sm:$0xf]
    %v170 = vld [vmem:[#allocation8 + $0x70] sm:$0xf]
    %v171 = vld [vmem:[#allocation8 + $0x74] sm:$0xf]
    %v172 = vld [vmem:[#allocation8 + $0x78] sm:$0xf]
    %v173 = vld [vmem:[#allocation8 + $0x7c] sm:$0xf]
    %v174 = vld [vmem:[%s4] sm:$0x1]
    %v176 = vperm.slane %v174, 0
    %v210 = vunpack.c.l.b16 %v142
    %v211 = vunpack.c.l.b16 %v143
    %v212 = vunpack.c.l.b16 %v144
    %v213 = vunpack.c.l.b16 %v145
    %v214 = vunpack.c.l.b16 %v146
    %v215 = vunpack.c.l.b16 %v147
    %v216 = vunpack.c.l.b16 %v148
    %v217 = vunpack.c.l.b16 %v149
    %v218 = vunpack.c.l.b16 %v150
    %v219 = vunpack.c.l.b16 %v151
    %v220 = vunpack.c.l.b16 %v152
    %v221 = vunpack.c.l.b16 %v153
    %v222 = vunpack.c.l.b16 %v154
    %v223 = vunpack.c.l.b16 %v155
    %v224 = vunpack.c.l.b16 %v156
    %v225 = vunpack.c.l.b16 %v157
    %v226 = vunpack.c.l.b16 %v158
    %v227 = vunpack.c.l.b16 %v159
    %v228 = vunpack.c.l.b16 %v160
    %v229 = vunpack.c.l.b16 %v161
    %v230 = vunpack.c.l.b16 %v162
    %v231 = vunpack.c.l.b16 %v163
    %v232 = vunpack.c.l.b16 %v164
    %v233 = vunpack.c.l.b16 %v165
    %v234 = vunpack.c.l.b16 %v166
    %v235 = vunpack.c.l.b16 %v167
    %v236 = vunpack.c.l.b16 %v168
    %v237 = vunpack.c.l.b16 %v169
    %v238 = vunpack.c.l.b16 %v170
    %v239 = vunpack.c.l.b16 %v171
    %v240 = vunpack.c.l.b16 %v172
    %v241 = vunpack.c.l.b16 %v173
    %v242 = vpack.c.b16 %v211, %v210
    %v243 = vpack.c.b16 %v213, %v212
    %v244 = vpack.c.b16 %v215, %v214
    %v245 = vpack.c.b16 %v217, %v216
    %v246 = vpack.c.b16 %v219, %v218
    %v247 = vpack.c.b16 %v221, %v220
    %v248 = vpack.c.b16 %v223, %v222
    %v249 = vpack.c.b16 %v225, %v224
    %v250 = vpack.c.b16 %v227, %v226
    %v251 = vpack.c.b16 %v229, %v228
    %v252 = vpack.c.b16 %v231, %v230
    %v253 = vpack.c.b16 %v233, %v232
    %v254 = vpack.c.b16 %v235, %v234
    %v255 = vpack.c.b16 %v237, %v236
    %v256 = vpack.c.b16 %v239, %v238
    %v257 = vpack.c.b16 %v241, %v240
    %274 = vmatpush.bf16.msra.mxu0 %v249
    %275 = vmatpush.bf16.msra.mxu0 %v248
    %276 = vmatpush.bf16.msra.mxu0 %v247
    %277 = vmatpush.bf16.msra.mxu0 %v246
    %278 = vmatpush.bf16.msra.mxu0 %v245
    %279 = vmatpush.bf16.msra.mxu0 %v244
    %280 = vmatpush.bf16.msra.mxu0 %v243
    %281 = vmatpush.bf16.msra.mxu0 %v242
    %282 = vmatmul.bf16.gmra.mxu0 %v140
    %v283 = vpop.f32.mrf.mxu0
    %v284 = vadd.f32 %v176, %v283
    %v285 = vpop.f32.mrf.mxu0
    %286 = vdwg.mxu0
    %287 = vmatpush.bf16.msra.mxu0 %v257
    %288 = vmatpush.bf16.msra.mxu0 %v256
    %289 = vmatpush.bf16.msra.mxu0 %v255
    %290 = vmatpush.bf16.msra.mxu0 %v254
    %291 = vmatpush.bf16.msra.mxu0 %v253
    %292 = vmatpush.bf16.msra.mxu0 %v252
    %293 = vmatpush.bf16.msra.mxu0 %v251
    %294 = vmatpush.bf16.msra.mxu0 %v250
    %295 = vmatmul.bf16.gmra.mxu0 %v141
    %v296 = vpop.f32.mrf.mxu0
    %v297 = vadd.f32 %v284, %v296
    %v298 = vpop.f32.mrf.mxu0
    %299 = vdwg.mxu0
    %300 = vst [vmem:[#allocation10] sm:$0xff] %v297
    // Predicated region
    $region38: #{tpu_custom_call.1} parent=1 // pred_check
      _
    $region39: #{tpu_custom_call.1} parent=1 // pred_check_branch
      %302 = sbr.rel (0) target = $region41
    $region40: #{tpu_custom_call.1} parent=1 // pred_region
      %304 = vsyncadd [#allocation4], 0
      %s306 = sshll.u32 [#allocation10], 4
      %s307 = int_to_ptr.vmem [resolvable:$true] %s306
      %s308 = sshll.u32 %s5, 4
      %s309 = int_to_ptr.hbm [resolvable:$true] %s308
      %311 = dma.vmem_to_hbm [thread:$0]  %s307, 128, %s309, [#allocation4]
    $region41: #{tpu_custom_call.1} parent=1 // pred_fallthru
      _
    // Predicated region
    $region42: #{tpu_custom_call.1} parent=1 // pred_check
      _
    $region43: #{tpu_custom_call.1} parent=1 // pred_check_branch
      %313 = sbr.rel (0) target = $region45
    $region44: #{tpu_custom_call.1} parent=1 // pred_region
      %315 = dma.done [#allocation4], 128
    $region45: #{tpu_custom_call.1} parent=1 // pred_fallthru
      _
    %316 = vsyncpa [#allocation3], 1
    %317 = vsyncpa [#allocation6], 1
    %318 = vsyncpa [#allocation9], 1
    %319 = vsyncpa [#allocation4], 1

</llo_original>
